<compile_context>
chip_gen: v7x
topology: tpu7x:2x2x1
jax: 0.10.0
libtpu: 0.0.40
codegen_flags: <defaults>
</compile_context>

<pallas_src>
import math

import jax
import jax.numpy as jnp
from jax.experimental import pallas as pl
from jax.experimental.pallas import tpu as pltpu


def _round_up(x, m):
    return ((x + m - 1) // m) * m


def _noisy_linear_kernel(x_ref, wmu_ref, wsig_ref, eps_in_ref, eps_out_ref,
                         bmu_ref, bsig_ref, o_ref, acc_ref):
    k = pl.program_id(1)

    @pl.when(k == 0)
    def _():
        acc_ref[...] = jnp.zeros_like(acc_ref)

    # Rank-1 factorized noise: weight_epsilon(K,N) = eps_in(K,1) * eps_out(1,N).
    # Noise mix on the VPU, matmul on the MXU; weights already (K, N), no transpose.
    w_eff = wmu_ref[...] + wsig_ref[...] * (eps_in_ref[...] * eps_out_ref[...])
    acc_ref[...] += jnp.dot(x_ref[...], w_eff,
                            preferred_element_type=jnp.float32)

    @pl.when(k == pl.num_programs(1) - 1)
    def _():
        b_eff = bmu_ref[...] + bsig_ref[...] * eps_out_ref[...]
        o_ref[...] = (acc_ref[...] + b_eff).astype(o_ref.dtype)


def _plain_linear_kernel(x_ref, wmu_ref, bmu_ref, o_ref, acc_ref):
    k = pl.program_id(1)

    @pl.when(k == 0)
    def _():
        acc_ref[...] = jnp.zeros_like(acc_ref)

    acc_ref[...] += jnp.dot(x_ref[...], wmu_ref[...],
                            preferred_element_type=jnp.float32)

    @pl.when(k == pl.num_programs(1) - 1)
    def _():
        o_ref[...] = (acc_ref[...] + bmu_ref[...]).astype(o_ref.dtype)


def noisy_linear_forward(x, params, training=True, *, tn_max=256, tk_max=512):
    """Pallas implementation of NoisyLinear.forward.

    x: (B, in_features) float32
    params: dict with weight_mu/weight_sigma (out, in), bias_mu/bias_sigma (out,),
            and factorized noise eps_in (in,), eps_out (out,).
    """
    B, in_f = x.shape
    out_f = params["weight_mu"].shape[0]
    dtype = x.dtype

    # Tile sizes (multiples of 128) and lane-dense padded extents.
    # Sized conservatively so double-buffered tiles stay well under v7x's
    # 32 MiB scoped / 64 MiB physical VMEM.
    tn = min(tn_max, _round_up(out_f, 128))
    tk = min(tk_max, _round_up(in_f, 128))
    B_pad = _round_up(B, 8)
    N_pad = _round_up(out_f, tn)
    K_pad = _round_up(in_f, tk)

    def pad2(a, rows, cols):
        return jnp.pad(a, ((0, rows - a.shape[0]), (0, cols - a.shape[1])))

    x_p = pad2(x, B_pad, K_pad)
    # Pre-transpose weights once (wrapper-side) to (K, N) -> plain (B,K)@(K,N).
    wmu_t = pad2(params["weight_mu"].T, K_pad, N_pad)
    bmu = pad2(params["bias_mu"].reshape(1, out_f), 1, N_pad)

    grid = (N_pad // tn, K_pad // tk)
    out_shape = jax.ShapeDtypeStruct((B_pad, N_pad), dtype)
    compiler_params = pltpu.CompilerParams(
        dimension_semantics=("parallel", "arbitrary"),
        vmem_limit_bytes=32 * 1024 * 1024,
    )

    x_spec = pl.BlockSpec((B_pad, tk), lambda n, k: (0, k))
    w_spec = pl.BlockSpec((tk, tn), lambda n, k: (k, n))
    col_spec = pl.BlockSpec((tk, 1), lambda n, k: (k, 0))     # eps_in (K, 1)
    row_spec = pl.BlockSpec((1, tn), lambda n, k: (0, n))     # eps_out / biases (1, N)
    out_spec = pl.BlockSpec((B_pad, tn), lambda n, k: (0, n))
    scratch = [pltpu.VMEM((B_pad, tn), jnp.float32)]

    if training:
        wsig_t = pad2(params["weight_sigma"].T, K_pad, N_pad)
        eps_in = pad2(params["eps_in"].reshape(in_f, 1), K_pad, 1)
        eps_out = pad2(params["eps_out"].reshape(1, out_f), 1, N_pad)
        bsig = pad2(params["bias_sigma"].reshape(1, out_f), 1, N_pad)
        y = pl.pallas_call(
            _noisy_linear_kernel,
            out_shape=out_shape,
            grid_spec=pltpu.PrefetchScalarGridSpec(
                num_scalar_prefetch=0,
                grid=grid,
                in_specs=[x_spec, w_spec, w_spec, col_spec, row_spec,
                          row_spec, row_spec],
                out_specs=out_spec,
                scratch_shapes=scratch),
            compiler_params=compiler_params,
        )(x_p, wmu_t, wsig_t, eps_in, eps_out, bmu, bsig)
    else:
        # TODO(synk): for tiny eval-mode shapes XLA's native GEMM is usually at
        # least as good; the tiled Pallas path is kept here for API parity.
        y = pl.pallas_call(
            _plain_linear_kernel,
            out_shape=out_shape,
            grid_spec=pltpu.PrefetchScalarGridSpec(
                num_scalar_prefetch=0,
                grid=grid,
                in_specs=[x_spec, w_spec, row_spec],
                out_specs=out_spec,
                scratch_shapes=scratch),
            compiler_params=compiler_params,
        )(x_p, wmu_t, bmu)

    return y[:B, :out_f]


def init_noisy_linear_params(key, input_shape, output_shape, std_init=0.5):
    """Replica of NoisyLinear._reset_parameters / _reset_noise (this module uses
    torch.rand, i.e. U[0,1), for the factorized noise)."""
    k_wmu, k_bmu, k_ein, k_eout = jax.random.split(key, 4)
    mu_range = 1.0 / math.sqrt(input_shape)
    sigma_val = std_init / math.sqrt(input_shape)

    weight_mu = jax.random.uniform(
        k_wmu, (output_shape, input_shape), jnp.float32, -mu_range, mu_range)
    bias_mu = jax.random.uniform(
        k_bmu, (output_shape,), jnp.float32, -mu_range, mu_range)
    weight_sigma = jnp.full((output_shape, input_shape), sigma_val, jnp.float32)
    bias_sigma = jnp.full((output_shape,), sigma_val, jnp.float32)

    def f(u):
        return jnp.sign(u) * jnp.sqrt(jnp.abs(u))

    eps_in = f(jax.random.uniform(k_ein, (input_shape,), jnp.float32))
    eps_out = f(jax.random.uniform(k_eout, (output_shape,), jnp.float32))

    return {
        "weight_mu": weight_mu,
        "weight_sigma": weight_sigma,
        "bias_mu": bias_mu,
        "bias_sigma": bias_sigma,
        # Rank-1 factors; dense weight_epsilon = outer(eps_out, eps_in),
        # bias_epsilon = eps_out. Never materialized for the kernel.
        "eps_in": eps_in,
        "eps_out": eps_out,
    }


if __name__ == "__main__":
    key = jax.random.PRNGKey(0)
    k_param, k_x = jax.random.split(key)

    B, IN, OUT = 8, 32, 64
    params = init_noisy_linear_params(k_param, IN, OUT, std_init=0.5)
    x = jax.random.normal(k_x, (B, IN), jnp.float32)

    # Training-mode (noisy) forward on the Pallas kernel.
    y = jax.block_until_ready(noisy_linear_forward(x, params, training=True))

    # Reference check in plain JAX (dense epsilon rebuilt only for verification).
    w_eps = jnp.outer(params["eps_out"], params["eps_in"])
    w_eff = params["weight_mu"] + params["weight_sigma"] * w_eps
    b_eff = params["bias_mu"] + params["bias_sigma"] * params["eps_out"]
    y_ref = x @ w_eff.T + b_eff
    assert y.shape == (B, OUT)
    assert jnp.allclose(y, y_ref, atol=1e-5, rtol=1e-5)

    # Eval-mode forward (no noise).
    y_eval = jax.block_until_ready(noisy_linear_forward(x, params, training=False))
    y_eval_ref = x @ params["weight_mu"].T + params["bias_mu"]
    assert jnp.allclose(y_eval, y_eval_ref, atol=1e-5, rtol=1e-5)

    print("KERNEL_OK")
</pallas_src>

<mosaic_0001>
module attributes {stable_mosaic.version = 11 : i64} {
  func.func @_noisy_linear_kernel(%arg0: i32, %arg1: i32, %arg2: memref<8x128xf32, #tpu.memory_space<vmem>>, %arg3: memref<128x128xf32, #tpu.memory_space<vmem>>, %arg4: memref<128x128xf32, #tpu.memory_space<vmem>>, %arg5: memref<128x1xf32, #tpu.memory_space<vmem>>, %arg6: memref<1x128xf32, #tpu.memory_space<vmem>>, %arg7: memref<1x128xf32, #tpu.memory_space<vmem>>, %arg8: memref<1x128xf32, #tpu.memory_space<vmem>>, %arg9: memref<8x128xf32, #tpu.memory_space<vmem>>, %arg10: memref<8x128xf32, #tpu.memory_space<vmem>>) attributes {dimension_semantics = [#tpu.dimension_semantics<parallel>, #tpu.dimension_semantics<arbitrary>], iteration_bounds = array<i64: 1, 1>, scalar_prefetch = 0 : i64, scratch_operands = 1 : i64, tpu.core_type = #tpu.core_type<tc>, window_params = [{transform_indices = @transform_0, window_bounds = array<i64: 8, 128>}, {transform_indices = @transform_1, window_bounds = array<i64: 128, 128>}, {transform_indices = @transform_2, window_bounds = array<i64: 128, 128>}, {transform_indices = @transform_3, window_bounds = array<i64: 128, 1>}, {transform_indices = @transform_4, window_bounds = array<i64: 1, 128>}, {transform_indices = @transform_5, window_bounds = array<i64: 1, 128>}, {transform_indices = @transform_6, window_bounds = array<i64: 1, 128>}, {transform_indices = @transform_7, window_bounds = array<i64: 8, 128>}]} {
    %c0_i32 = arith.constant 0 : i32
    %0 = arith.cmpi eq, %arg1, %c0_i32 : i32
    %1 = arith.extui %0 : i1 to i32
    %c0_i32_0 = arith.constant 0 : i32
    %2 = arith.cmpi ne, %1, %c0_i32_0 : i32
    scf.if %2 {
      %cst_16 = arith.constant 0.000000e+00 : f32
      %20 = vector.broadcast %cst_16 : f32 to vector<8x128xf32>
      %c0_17 = arith.constant 0 : index
      %c0_18 = arith.constant 0 : index
      %21 = vector.load %arg10[%c0_17, %c0_18] : memref<8x128xf32, #tpu.memory_space<vmem>>, vector<8x128xf32>
      tpu.vector_store %arg10[%c0_17, %c0_18], %20 {strides = array<i32>} : memref<8x128xf32, #tpu.memory_space<vmem>>, vector<8x128xf32>,
    } else {
    }
    %c0 = arith.constant 0 : index
    %c0_1 = arith.constant 0 : index
    %3 = vector.load %arg3[%c0, %c0_1] : memref<128x128xf32, #tpu.memory_space<vmem>>, vector<128x128xf32>
    %c0_2 = arith.constant 0 : index
    %c0_3 = arith.constant 0 : index
    %4 = vector.load %arg4[%c0_2, %c0_3] : memref<128x128xf32, #tpu.memory_space<vmem>>, vector<128x128xf32>
    %c0_4 = arith.constant 0 : index
    %c0_5 = arith.constant 0 : index
    %5 = vector.load %arg5[%c0_4, %c0_5] : memref<128x1xf32, #tpu.memory_space<vmem>>, vector<128x1xf32>
    %c0_6 = arith.constant 0 : index
    %c0_7 = arith.constant 0 : index
    %6 = vector.load %arg6[%c0_6, %c0_7] : memref<1x128xf32, #tpu.memory_space<vmem>>, vector<1x128xf32>
    %7 = vector.broadcast %5 : vector<128x1xf32> to vector<128x128xf32>
    %8 = vector.broadcast %6 : vector<1x128xf32> to vector<128x128xf32>
    %9 = arith.mulf %7, %8 : vector<128x128xf32>
    %10 = arith.mulf %4, %9 : vector<128x128xf32>
    %11 = arith.addf %3, %10 : vector<128x128xf32>
    %c0_8 = arith.constant 0 : index
    %c0_9 = arith.constant 0 : index
    %12 = vector.load %arg10[%c0_8, %c0_9] : memref<8x128xf32, #tpu.memory_space<vmem>>, vector<8x128xf32>
    %c0_10 = arith.constant 0 : index
    %c0_11 = arith.constant 0 : index
    %13 = vector.load %arg2[%c0_10, %c0_11] : memref<8x128xf32, #tpu.memory_space<vmem>>, vector<8x128xf32>
    %cst = arith.constant dense<0.000000e+00> : vector<8x128xf32>
    %14 = tpu.matmul %13, %11, %cst {dimension_numbers = #tpu.dot_dimension_numbers<[1], [0], [0], [1], [0, 0, 1, 1], [], []>} : vector<8x128xf32>, vector<128x128xf32>, vector<8x128xf32> -> vector<8x128xf32>
    %15 = arith.addf %12, %14 : vector<8x128xf32>
    %c0_12 = arith.constant 0 : index
    %c0_13 = arith.constant 0 : index
    %16 = vector.load %arg10[%c0_12, %c0_13] : memref<8x128xf32, #tpu.memory_space<vmem>>, vector<8x128xf32>
    tpu.vector_store %arg10[%c0_12, %c0_13], %15 {strides = array<i32>} : memref<8x128xf32, #tpu.memory_space<vmem>>, vector<8x128xf32>,
    %c0_i32_14 = arith.constant 0 : i32
    %17 = arith.cmpi eq, %arg1, %c0_i32_14 : i32
    %18 = arith.extui %17 : i1 to i32
    %c0_i32_15 = arith.constant 0 : i32
    %19 = arith.cmpi ne, %18, %c0_i32_15 : i32
    scf.if %19 {
      %c0_16 = arith.constant 0 : index
      %c0_17 = arith.constant 0 : index
      %20 = vector.load %arg7[%c0_16, %c0_17] : memref<1x128xf32, #tpu.memory_space<vmem>>, vector<1x128xf32>
      %c0_18 = arith.constant 0 : index
      %c0_19 = arith.constant 0 : index
      %21 = vector.load %arg8[%c0_18, %c0_19] : memref<1x128xf32, #tpu.memory_space<vmem>>, vector<1x128xf32>
      %c0_20 = arith.constant 0 : index
      %c0_21 = arith.constant 0 : index
      %22 = vector.load %arg6[%c0_20, %c0_21] : memref<1x128xf32, #tpu.memory_space<vmem>>, vector<1x128xf32>
      %23 = arith.mulf %21, %22 : vector<1x128xf32>
      %24 = arith.addf %20, %23 : vector<1x128xf32>
      %c0_22 = arith.constant 0 : index
      %c0_23 = arith.constant 0 : index
      %25 = vector.load %arg10[%c0_22, %c0_23] : memref<8x128xf32, #tpu.memory_space<vmem>>, vector<8x128xf32>
      %26 = vector.broadcast %24 : vector<1x128xf32> to vector<8x128xf32>
      %27 = arith.addf %25, %26 : vector<8x128xf32>
      %c0_24 = arith.constant 0 : index
      %c0_25 = arith.constant 0 : index
      %28 = vector.load %arg9[%c0_24, %c0_25] : memref<8x128xf32, #tpu.memory_space<vmem>>, vector<8x128xf32>
      tpu.vector_store %arg9[%c0_24, %c0_25], %27 {strides = array<i32>} : memref<8x128xf32, #tpu.memory_space<vmem>>, vector<8x128xf32>,
    } else {
    }
    return
  }
  func.func @transform_0(%arg0: i32, %arg1: i32) -> (i32, i32) {
    %c0_i32 = arith.constant 0 : i32
    %c0_i32_0 = arith.constant 0 : i32
    return %c0_i32, %arg1 : i32, i32
  }
  func.func @transform_1(%arg0: i32, %arg1: i32) -> (i32, i32) {
    %c0_i32 = arith.constant 0 : i32
    return %arg1, %arg0 : i32, i32
  }
  func.func @transform_2(%arg0: i32, %arg1: i32) -> (i32, i32) {
    %c0_i32 = arith.constant 0 : i32
    return %arg1, %arg0 : i32, i32
  }
  func.func @transform_3(%arg0: i32, %arg1: i32) -> (i32, i32) {
    %c0_i32 = arith.constant 0 : i32
    %c0_i32_0 = arith.constant 0 : i32
    return %arg1, %c0_i32 : i32, i32
  }
  func.func @transform_4(%arg0: i32, %arg1: i32) -> (i32, i32) {
    %c0_i32 = arith.constant 0 : i32
    %c0_i32_0 = arith.constant 0 : i32
    return %c0_i32, %arg0 : i32, i32
  }
  func.func @transform_5(%arg0: i32, %arg1: i32) -> (i32, i32) {
    %c0_i32 = arith.constant 0 : i32
    %c0_i32_0 = arith.constant 0 : i32
    return %c0_i32, %arg0 : i32, i32
  }
  func.func @transform_6(%arg0: i32, %arg1: i32) -> (i32, i32) {
    %c0_i32 = arith.constant 0 : i32
    %c0_i32_0 = arith.constant 0 : i32
    return %c0_i32, %arg0 : i32, i32
  }
  func.func @transform_7(%arg0: i32, %arg1: i32) -> (i32, i32) {
    %c0_i32 = arith.constant 0 : i32
    %c0_i32_0 = arith.constant 0 : i32
    return %c0_i32, %arg0 : i32, i32
  }
}

</mosaic_0001>

<llo_original>
// kernel: tpu_custom_call.1
$region0: #{tpu_custom_call.1}
  #allocation0 [shape = 'u32[]', space=smem, size = 0x4, offset = 0x4, fixed_abs, tag = 'smem constant byte address 0x4 - core index']
  #allocation1 [shape = 'u32[144,128]{1,0:T(1,128)}', space=vmem, size = 0x12000, scoped, tag = 'internal scratch']
  #allocation2 [shape = 'f32[8,128]{1,0:T(8,128)}', space=vmem, size = 0x1000, scoped, tag = 'scratch operand']
  %s0 = inlined_call_operand.hbm [shape: f32[8,128], index: 0, kind: input, shape index: {}]
  %s1 = inlined_call_operand.vmem [shape: f32[128,128], index: 1, kind: input, shape index: {}]
  %s2 = inlined_call_operand.hbm [shape: f32[128,128], index: 2, kind: input, shape index: {}]
  %s3 = inlined_call_operand.vmem [shape: f32[128,1], index: 3, kind: input, shape index: {}]
  %s4 = inlined_call_operand.vmem [shape: f32[1,128], index: 4, kind: input, shape index: {}]
  %s5 = inlined_call_operand.vmem [shape: f32[1,128], index: 5, kind: input, shape index: {}]
  %s6 = inlined_call_operand.vmem [shape: f32[1,128], index: 6, kind: input, shape index: {}]
  %s7 = inlined_call_operand.hbm [shape: f32[8,128], index: 7, kind: output, shape index: {}]
  %s8 = sld [smem:[#allocation0]]
  $region54: #{tpu_custom_call.1} parent=0
    _
  %s10 = ssub.s32 1, %s8
  %s11 = scalar_select 0, %s10, %s8
  $region1: #{tpu_custom_call.1} parent=0
    #allocation3 [shape = 'u8[4096]{0}', space=vmem, size = 0x1000, scoped, tag = 'input window, operand 0, single buffered']
    #allocation4 [shape = 's32[1]{0}', space=sflag, size = 0x4, scoped, tag = 'scoped memory for tpu_custom_call.1']
    #allocation5 [shape = 's32[1]{0}', space=sflag, size = 0x4, scoped, tag = 'scoped memory for tpu_custom_call.1']
    #allocation6 [shape = 'u8[65536]{0}', space=vmem, size = 0x10000, scoped, tag = 'input window, operand 2, single buffered']
    #allocation7 [shape = 's32[1]{0}', space=sflag, size = 0x4, scoped, tag = 'scoped memory for tpu_custom_call.1']
    #allocation8 [shape = 'u8[4096]{0}', space=vmem, size = 0x1000, scoped, tag = 'output window, operand 0, single buffered']
    %12 = vsyncpa [#allocation4], 0
    %13 = vsyncpa [#allocation7], 0
    %14 = vsyncpa [#allocation5], 0
    // Predicated region
    $region2: #{tpu_custom_call.1} parent=1 // pred_check
      _
    $region3: #{tpu_custom_call.1} parent=1 // pred_check_branch
      %16 = sbr.rel (0) target = $region5
    $region4: #{tpu_custom_call.1} parent=1 // pred_region
      %s18 = ssub.s32 128, 128
      %19 = vsyncadd [#allocation4], %s18
      %s21 = sshll.u32 [#allocation3], 4
      %s22 = int_to_ptr.vmem [resolvable:$true] %s21
      %24 = dma.hbm_to_vmem [thread:$0]  %s0, 128, %s22, [#allocation4]
    $region5: #{tpu_custom_call.1} parent=1 // pred_fallthru
      _
    // Predicated region
    $region6: #{tpu_custom_call.1} parent=1 // pred_check
      _
    $region7: #{tpu_custom_call.1} parent=1 // pred_check_branch
      %26 = sbr.rel (0) target = $region9
    $region8: #{tpu_custom_call.1} parent=1 // pred_region
      _
    $region9: #{tpu_custom_call.1} parent=1 // pred_fallthru
      _
    // Predicated region
    $region10: #{tpu_custom_call.1} parent=1 // pred_check
      _
    $region11: #{tpu_custom_call.1} parent=1 // pred_check_branch
      %28 = sbr.rel (0) target = $region13
    $region12: #{tpu_custom_call.1} parent=1 // pred_region
      %s30 = ssub.s32 2048, 2048
      %31 = vsyncadd [#allocation7], %s30
      %s32 = sshll.u32 [#allocation6], 4
      %s33 = int_to_ptr.vmem [resolvable:$true] %s32
      %38 = dma.hbm_to_vmem [thread:$0]  %s2, 2048, %s33, [#allocation7], 128, 128, 8
    $region13: #{tpu_custom_call.1} parent=1 // pred_fallthru
      _
    // Predicated region
    $region14: #{tpu_custom_call.1} parent=1 // pred_check
      _
    $region15: #{tpu_custom_call.1} parent=1 // pred_check_branch
      %40 = sbr.rel (0) target = $region17
    $region16: #{tpu_custom_call.1} parent=1 // pred_region
      _
    $region17: #{tpu_custom_call.1} parent=1 // pred_fallthru
      _
    // Predicated region
    $region18: #{tpu_custom_call.1} parent=1 // pred_check
      _
    $region19: #{tpu_custom_call.1} parent=1 // pred_check_branch
      %42 = sbr.rel (0) target = $region21
    $region20: #{tpu_custom_call.1} parent=1 // pred_region
      _
    $region21: #{tpu_custom_call.1} parent=1 // pred_fallthru
      _
    // Predicated region
    $region22: #{tpu_custom_call.1} parent=1 // pred_check
      _
    $region23: #{tpu_custom_call.1} parent=1 // pred_check_branch
      %44 = sbr.rel (0) target = $region25
    $region24: #{tpu_custom_call.1} parent=1 // pred_region
      _
    $region25: #{tpu_custom_call.1} parent=1 // pred_fallthru
      _
    // Predicated region
    $region26: #{tpu_custom_call.1} parent=1 // pred_check
      _
    $region27: #{tpu_custom_call.1} parent=1 // pred_check_branch
      %46 = sbr.rel (0) target = $region29
    $region28: #{tpu_custom_call.1} parent=1 // pred_region
      _
    $region29: #{tpu_custom_call.1} parent=1 // pred_fallthru
      _
    // Predicated region
    $region30: #{tpu_custom_call.1} parent=1 // pred_check
      _
    $region31: #{tpu_custom_call.1} parent=1 // pred_check_branch
      %48 = sbr.rel (0) target = $region33
    $region32: #{tpu_custom_call.1} parent=1 // pred_region
      %49 = dma.done [#allocation4], 128
    $region33: #{tpu_custom_call.1} parent=1 // pred_fallthru
      _
    // Predicated region
    $region34: #{tpu_custom_call.1} parent=1 // pred_check
      _
    $region35: #{tpu_custom_call.1} parent=1 // pred_check_branch
      %51 = sbr.rel (0) target = $region37
    $region36: #{tpu_custom_call.1} parent=1 // pred_region
      %52 = dma.done [#allocation7], 2048
    $region37: #{tpu_custom_call.1} parent=1 // pred_fallthru
      _
    %p53 = scmp.eq.s32.totalorder 0, 0
    // Predicated region
    $region38: #{tpu_custom_call.1} parent=1 // pred_check
      %p54 = pneg %p53
    $region39: #{tpu_custom_call.1} parent=1 // pred_check_branch
      %56 = sbr.rel (%p54) target = $region41
    $region40: #{tpu_custom_call.1} parent=1 // pred_region
      %57 = vst [vmem:[#allocation2] sm:$0xff] 0.0
    $region41: #{tpu_custom_call.1} parent=1 // pred_fallthru
      _
    %v58 = vld [vmem:[%s1] sm:$0xff]
    %v59 = vld [vmem:[%s1 + $0x8] sm:$0xff]
    %v60 = vld [vmem:[%s1 + $0x10] sm:$0xff]
    %v61 = vld [vmem:[%s1 + $0x18] sm:$0xff]
    %v62 = vld [vmem:[%s1 + $0x20] sm:$0xff]
    %v63 = vld [vmem:[%s1 + $0x28] sm:$0xff]
    %v64 = vld [vmem:[%s1 + $0x30] sm:$0xff]
    %v65 = vld [vmem:[%s1 + $0x38] sm:$0xff]
    %v66 = vld [vmem:[%s1 + $0x40] sm:$0xff]
    %v67 = vld [vmem:[%s1 + $0x48] sm:$0xff]
    %v68 = vld [vmem:[%s1 + $0x50] sm:$0xff]
    %v69 = vld [vmem:[%s1 + $0x58] sm:$0xff]
    %v70 = vld [vmem:[%s1 + $0x60] sm:$0xff]
    %v71 = vld [vmem:[%s1 + $0x68] sm:$0xff]
    %v72 = vld [vmem:[%s1 + $0x70] sm:$0xff]
    %v73 = vld [vmem:[%s1 + $0x78] sm:$0xff]
    %v74 = vld [vmem:[#allocation6] sm:$0xff]
    %v75 = vld [vmem:[#allocation6 + $0x8] sm:$0xff]
    %v76 = vld [vmem:[#allocation6 + $0x10] sm:$0xff]
    %v77 = vld [vmem:[#allocation6 + $0x18] sm:$0xff]
    %v78 = vld [vmem:[#allocation6 + $0x20] sm:$0xff]
    %v79 = vld [vmem:[#allocation6 + $0x28] sm:$0xff]
    %v80 = vld [vmem:[#allocation6 + $0x30] sm:$0xff]
    %v81 = vld [vmem:[#allocation6 + $0x38] sm:$0xff]
    %v82 = vld [vmem:[#allocation6 + $0x40] sm:$0xff]
    %v83 = vld [vmem:[#allocation6 + $0x48] sm:$0xff]
    %v84 = vld [vmem:[#allocation6 + $0x50] sm:$0xff]
    %v85 = vld [vmem:[#allocation6 + $0x58] sm:$0xff]
    %v86 = vld [vmem:[#allocation6 + $0x60] sm:$0xff]
    %v87 = vld [vmem:[#allocation6 + $0x68] sm:$0xff]
    %v88 = vld [vmem:[#allocation6 + $0x70] sm:$0xff]
    %v89 = vld [vmem:[#allocation6 + $0x78] sm:$0xff]
    %v90 = vld [vmem:[%s3] sm:$0xff]
    %v91 = vld [vmem:[%s3 + $0x8] sm:$0xff]
    %v92 = vld [vmem:[%s3 + $0x10] sm:$0xff]
    %v93 = vld [vmem:[%s3 + $0x18] sm:$0xff]
    %v94 = vld [vmem:[%s3 + $0x20] sm:$0xff]
    %v95 = vld [vmem:[%s3 + $0x28] sm:$0xff]
    %v96 = vld [vmem:[%s3 + $0x30] sm:$0xff]
    %v97 = vld [vmem:[%s3 + $0x38] sm:$0xff]
    %v98 = vld [vmem:[%s3 + $0x40] sm:$0xff]
    %v99 = vld [vmem:[%s3 + $0x48] sm:$0xff]
    %v100 = vld [vmem:[%s3 + $0x50] sm:$0xff]
    %v101 = vld [vmem:[%s3 + $0x58] sm:$0xff]
    %v102 = vld [vmem:[%s3 + $0x60] sm:$0xff]
    %v103 = vld [vmem:[%s3 + $0x68] sm:$0xff]
    %v104 = vld [vmem:[%s3 + $0x70] sm:$0xff]
    %v105 = vld [vmem:[%s3 + $0x78] sm:$0xff]
    %v106 = vld [vmem:[%s4] sm:$0x1]
    %108 = vset.pattern.permute.xlu0 0
    %109 = vperm.xlu0 %108, %v90
    %v110 = vpop.permute.xlu0 %109
    %113 = vset.pattern.permute.xlu0 0
    %114 = vperm.xlu0 %113, %v91
    %v115 = vpop.permute.xlu0 %114
    %118 = vset.pattern.permute.xlu0 0
    %119 = vperm.xlu0 %118, %v92
    %v120 = vpop.permute.xlu0 %119
    %123 = vset.pattern.permute.xlu0 0
    %124 = vperm.xlu0 %123, %v93
    %v125 = vpop.permute.xlu0 %124
    %128 = vset.pattern.permute.xlu0 0
    %129 = vperm.xlu0 %128, %v94
    %v130 = vpop.permute.xlu0 %129
    %133 = vset.pattern.permute.xlu0 0
    %134 = vperm.xlu0 %133, %v95
    %v135 = vpop.permute.xlu0 %134
    %138 = vset.pattern.permute.xlu0 0
    %139 = vperm.xlu0 %138, %v96
    %v140 = vpop.permute.xlu0 %139
    %143 = vset.pattern.permute.xlu0 0
    %144 = vperm.xlu0 %143, %v97
    %v145 = vpop.permute.xlu0 %144
    %148 = vset.pattern.permute.xlu0 0
    %149 = vperm.xlu0 %148, %v98
    %v150 = vpop.permute.xlu0 %149
    %153 = vset.pattern.permute.xlu0 0
    %154 = vperm.xlu0 %153, %v99
    %v155 = vpop.permute.xlu0 %154
    %158 = vset.pattern.permute.xlu0 0
    %159 = vperm.xlu0 %158, %v100
    %v160 = vpop.permute.xlu0 %159
    %163 = vset.pattern.permute.xlu0 0
    %164 = vperm.xlu0 %163, %v101
    %v165 = vpop.permute.xlu0 %164
    %168 = vset.pattern.permute.xlu0 0
    %169 = vperm.xlu0 %168, %v102
    %v170 = vpop.permute.xlu0 %169
    %173 = vset.pattern.permute.xlu0 0
    %174 = vperm.xlu0 %173, %v103
    %v175 = vpop.permute.xlu0 %174
    %178 = vset.pattern.permute.xlu0 0
    %179 = vperm.xlu0 %178, %v104
    %v180 = vpop.permute.xlu0 %179
    %183 = vset.pattern.permute.xlu0 0
    %184 = vperm.xlu0 %183, %v105
    %v185 = vpop.permute.xlu0 %184
    %v188 = vlaneseq
    %v189 = vshrl.u32 %v188, 7
    %v190 = vsub.s32 0, %v189
    %v191 = vrot.slane %v106, %v190
    %v193 = vmul.f32 %v110, %v191
    %v194 = vmul.f32 %v115, %v191
    %v195 = vmul.f32 %v120, %v191
    %v196 = vmul.f32 %v125, %v191
    %v197 = vmul.f32 %v130, %v191
    %v198 = vmul.f32 %v135, %v191
    %v199 = vmul.f32 %v140, %v191
    %v200 = vmul.f32 %v145, %v191
    %v201 = vmul.f32 %v150, %v191
    %v202 = vmul.f32 %v155, %v191
    %v203 = vmul.f32 %v160, %v191
    %v204 = vmul.f32 %v165, %v191
    %v205 = vmul.f32 %v170, %v191
    %v206 = vmul.f32 %v175, %v191
    %v207 = vmul.f32 %v180, %v191
    %v208 = vmul.f32 %v185, %v191
    %v209 = vmul.f32 %v74, %v193
    %v210 = vmul.f32 %v75, %v194
    %v211 = vmul.f32 %v76, %v195
    %v212 = vmul.f32 %v77, %v196
    %v213 = vmul.f32 %v78, %v197
    %v214 = vmul.f32 %v79, %v198
    %v215 = vmul.f32 %v80, %v199
    %v216 = vmul.f32 %v81, %v200
    %v217 = vmul.f32 %v82, %v201
    %v218 = vmul.f32 %v83, %v202
    %v219 = vmul.f32 %v84, %v203
    %v220 = vmul.f32 %v85, %v204
    %v221 = vmul.f32 %v86, %v205
    %v222 = vmul.f32 %v87, %v206
    %v223 = vmul.f32 %v88, %v207
    %v224 = vmul.f32 %v89, %v208
    %v225 = vadd.f32 %v58, %v209
    %v226 = vadd.f32 %v59, %v210
    %v227 = vadd.f32 %v60, %v211
    %v228 = vadd.f32 %v61, %v212
    %v229 = vadd.f32 %v62, %v213
    %v230 = vadd.f32 %v63, %v214
    %v231 = vadd.f32 %v64, %v215
    %v232 = vadd.f32 %v65, %v216
    %v233 = vadd.f32 %v66, %v217
    %v234 = vadd.f32 %v67, %v218
    %v235 = vadd.f32 %v68, %v219
    %v236 = vadd.f32 %v69, %v220
    %v237 = vadd.f32 %v70, %v221
    %v238 = vadd.f32 %v71, %v222
    %v239 = vadd.f32 %v72, %v223
    %v240 = vadd.f32 %v73, %v224
    %v241 = vld [vmem:[#allocation2] sm:$0xff]
    %v242 = vld [vmem:[#allocation3] sm:$0xff]
    %243 = vmatprep.subr.mxu0 0.0
    %244 = vmatpush1.msra.mxu0 %v225
    %245 = vmatprep.subr.mxu0 0.0
    %246 = vmatpush1.msra.mxu0 %v226
    %247 = vmatprep.subr.mxu0 0.0
    %248 = vmatpush1.msra.mxu0 %v227
    %249 = vmatprep.subr.mxu0 0.0
    %250 = vmatpush1.msra.mxu0 %v228
    %251 = vmatprep.subr.mxu0 0.0
    %252 = vmatpush1.msra.mxu0 %v229
    %253 = vmatprep.subr.mxu0 0.0
    %254 = vmatpush1.msra.mxu0 %v230
    %255 = vmatprep.subr.mxu0 0.0
    %256 = vmatpush1.msra.mxu0 %v231
    %257 = vmatprep.subr.mxu0 0.0
    %258 = vmatpush1.msra.mxu0 %v232
    %259 = vmatprep.subr.mxu0 0.0
    %260 = vmatpush1.msra.mxu0 %v233
    %261 = vmatprep.subr.mxu0 0.0
    %262 = vmatpush1.msra.mxu0 %v234
    %263 = vmatprep.subr.mxu0 0.0
    %264 = vmatpush1.msra.mxu0 %v235
    %265 = vmatprep.subr.mxu0 0.0
    %266 = vmatpush1.msra.mxu0 %v236
    %267 = vmatprep.subr.mxu0 0.0
    %268 = vmatpush1.msra.mxu0 %v237
    %269 = vmatprep.subr.mxu0 0.0
    %270 = vmatpush1.msra.mxu0 %v238
    %271 = vmatprep.subr.mxu0 0.0
    %272 = vmatpush1.msra.mxu0 %v239
    %273 = vmatprep.subr.mxu0 0.0
    %274 = vmatpush1.msra.mxu0 %v240
    %275 = vmatprep.subr.mxu0 0.0
    %276 = vmatpush1.msra.mxu0 0.0
    %277 = vmatprep.subr.mxu0 0.0
    %278 = vmatpush1.msra.mxu0 0.0
    %279 = vmatprep.subr.mxu0 0.0
    %280 = vmatpush1.msra.mxu0 0.0
    %281 = vmatprep.subr.mxu0 0.0
    %282 = vmatpush1.msra.mxu0 0.0
    %283 = vmatprep.subr.mxu0 0.0
    %284 = vmatpush1.msra.mxu0 0.0
    %285 = vmatprep.subr.mxu0 0.0
    %286 = vmatpush1.msra.mxu0 0.0
    %287 = vmatprep.subr.mxu0 0.0
    %288 = vmatpush1.msra.mxu0 0.0
    %289 = vmatprep.subr.mxu0 0.0
    %290 = vmatpush1.msra.mxu0 0.0
    %291 = vmatprep.subr.mxu0 0.0
    %292 = vmatpush1.msra.mxu0 0.0
    %293 = vmatprep.subr.mxu0 0.0
    %294 = vmatpush1.msra.mxu0 0.0
    %295 = vmatprep.subr.mxu0 0.0
    %296 = vmatpush1.msra.mxu0 0.0
    %297 = vmatprep.subr.mxu0 0.0
    %298 = vmatpush1.msra.mxu0 0.0
    %299 = vmatprep.subr.mxu0 0.0
    %300 = vmatpush1.msra.mxu0 0.0
    %301 = vmatprep.subr.mxu0 0.0
    %302 = vmatpush1.msra.mxu0 0.0
    %303 = vmatprep.subr.mxu0 0.0
    %304 = vmatpush1.msra.mxu0 0.0
    %305 = vmatprep.subr.mxu0 0.0
    %306 = vmatpush1.msra.mxu0 0.0
    %307 = vmatprep.mubr.f32.mxu0 0.0
    %308 = vmatmul.mubr.f32.gmra.mrb[0].mxu0 %v242
    %v309 = vpop.f32.mrb[0].mxu0
    %v310 = vadd.f32 0.0, %v309
    %v311 = vpop.f32.mrb[0].mxu0
    %312 = vdwg.mxu0
    %v313 = vadd.f32 %v241, %v310
    %314 = vst [vmem:[#allocation2] sm:$0xff] %v313
    // Predicated region
    $region42: #{tpu_custom_call.1} parent=1 // pred_check
      %p315 = pneg %p53
    $region43: #{tpu_custom_call.1} parent=1 // pred_check_branch
      %317 = sbr.rel (%p315) target = $region45
    $region44: #{tpu_custom_call.1} parent=1 // pred_region
      %v318 = vld [vmem:[%s5] sm:$0x1]
      %v319 = vld [vmem:[%s6] sm:$0x1]
      %v320 = vld [vmem:[%s4] sm:$0x1]
      %v321 = vmul.f32 %v319, %v320
      %v322 = vadd.f32 %v318, %v321
      %v323 = vld [vmem:[#allocation2] sm:$0xff]
      %v325 = vlaneseq
      %v326 = vshrl.u32 %v325, 7
      %v327 = vsub.s32 0, %v326
      %v328 = vrot.slane %v322, %v327
      %v330 = vadd.f32 %v323, %v328
      %331 = vst [vmem:[#allocation8] sm:$0xff] %v330
    $region45: #{tpu_custom_call.1} parent=1 // pred_fallthru
      _
    // Predicated region
    $region46: #{tpu_custom_call.1} parent=1 // pred_check
      _
    $region47: #{tpu_custom_call.1} parent=1 // pred_check_branch
      %333 = sbr.rel (0) target = $region49
    $region48: #{tpu_custom_call.1} parent=1 // pred_region
      %s335 = ssub.s32 128, 128
      %336 = vsyncadd [#allocation5], %s335
      %s338 = sshll.u32 [#allocation8], 4
      %s339 = int_to_ptr.vmem [resolvable:$true] %s338
      %341 = dma.vmem_to_hbm [thread:$0]  %s339, 128, %s7, [#allocation5]
    $region49: #{tpu_custom_call.1} parent=1 // pred_fallthru
      _
    // Predicated region
    $region50: #{tpu_custom_call.1} parent=1 // pred_check
      _
    $region51: #{tpu_custom_call.1} parent=1 // pred_check_branch
      %343 = sbr.rel (0) target = $region53
    $region52: #{tpu_custom_call.1} parent=1 // pred_region
      %344 = dma.done [#allocation5], 128
    $region53: #{tpu_custom_call.1} parent=1 // pred_fallthru
      _
    %345 = vsyncpa [#allocation4], 1
    %346 = vsyncpa [#allocation7], 1
    %347 = vsyncpa [#allocation5], 1

</llo_original>
